<compile_context>
chip_gen: v7x
topology: tpu7x:2x2x1
jax: 0.10.0
libtpu: 0.0.40
codegen_flags: <defaults>
</compile_context>

<pallas_src>
import functools

import jax
import jax.numpy as jnp
from jax.experimental import pallas as pl
from jax.experimental.pallas import tpu as pltpu


def _dsc_kernel(x_ref, halo_ref, wdw_ref, bdw_ref, wpw_ref, spw_ref, bpw_ref,
                out_ref, ext_ref, *, kernel_size: int, padding: int, use_res: bool):
    """One (batch, length-tile) per grid step.  All tiles are (channels, length).

    x_ref    : (1, Cin, TL)      input tile (also the residual), input dtype
    halo_ref : (1, 1, Cin, 2P)   merged halo slab: [:, :P] = first P cols of the NEXT
                                 tile, [:, P:] = last P cols of the PREVIOUS tile
                                 (zeros at the global boundaries)
    wdw_ref  : (Cin, K)  f32     depthwise weights, BN scale folded in
    bdw_ref  : (Cin, 1)  f32     folded BN bias (depthwise branch)
    wpw_ref  : (Cout, Cin) bf16  pointwise weights (unscaled)
    spw_ref  : (Cout, 1) f32     BN scale (pointwise branch, applied post-matmul)
    bpw_ref  : (Cout, 1) f32     folded BN bias (pointwise branch)
    out_ref  : (1, Cout, TL)     output tile
    ext_ref  : (Cin, TL)         VMEM scratch: circular extension of the tile.
    """
    cin = x_ref.shape[1]
    tl = x_ref.shape[2]
    p = padding
    k0 = kernel_size // 2

    xt = x_ref[0]                                   # (Cin, TL), input dtype

    # Circular-extension buffer: a roll of the tile wraps lanes around; for those
    # wrapped lanes the correct values are the neighbor-tile halos.  Placing the
    # right halo at lanes [0, P) and the left halo at lanes [TL-P, TL) makes
    # roll(ext, shift) deliver exactly the needed value at every boundary lane.
    # Only those 2P lanes are ever selected below, so the rest of the (persistent)
    # scratch may hold stale data without affecting results (select, not arithmetic).
    ext_ref[:, 0:p] = halo_ref[0, 0, :, 0:p]            # right halo
    ext_ref[:, tl - p:tl] = halo_ref[0, 0, :, p:2 * p]  # left halo
    ext = ext_ref[...]

    lane = jax.lax.broadcasted_iota(jnp.int32, (cin, tl), 1)

    # Depthwise conv (stride 1): per-tap pltpu.roll (XLU) + masked boundary patch,
    # promoted to f32 per multiply (no full-tile upcast), f32 accumulation.
    acc = xt.astype(jnp.float32) * wdw_ref[:, k0:k0 + 1]     # center tap, no roll
    for k in range(kernel_size):                              # static unroll
        d = k - k0
        if d == 0:
            continue
        s = (-d) % tl                                         # roll(x, s)[l] == x[l + d]
        bulk = pltpu.roll(xt, shift=s, axis=1)
        edge = pltpu.roll(ext, shift=s, axis=1)
        mask = (lane >= tl - d) if d > 0 else (lane < -d)     # lanes that wrapped
        tap = jnp.where(mask, edge, bulk)
        acc = acc + tap.astype(jnp.float32) * wdw_ref[:, k:k + 1]

    # BN bias + ReLU
    y = jnp.maximum(acc + bdw_ref[...], 0.0)                  # (Cin, TL) f32

    # Pointwise (1x1) conv = MXU matmul over channels (bf16 operands, f32 accumulate),
    # then f32 BN scale + bias + ReLU.
    z = jnp.dot(wpw_ref[...], y.astype(jnp.bfloat16),
                preferred_element_type=jnp.float32)           # (Cout, TL) f32
    z = jnp.maximum(z * spw_ref[...] + bpw_ref[...], 0.0)

    if use_res:                                               # static (stride==1 and Cin==Cout)
        z = z + xt.astype(jnp.float32)

    out_ref[0] = z.astype(out_ref.dtype)


def _choose_tile(length: int, target: int) -> int:
    """Largest multiple of 128 that divides `length` and is <= target, else full length."""
    best = 0
    cand = 128
    lim = min(length, max(target, 128))
    while cand <= lim:
        if length % cand == 0:
            best = cand
        cand += 128
    return best if best > 0 else length


def depthwise_separable_conv(x_ncl, params, *, kernel_size=3, stride=1, padding=None,
                             tl_target=512):
    """x_ncl: (N, Cin, L), matching the PyTorch NCL convention (f32 or bf16).

    tl_target: length-tile size.  512 is sized for v7x's 64 MiB/TC VMEM; on v5e/v6e
    (128 MiB VMEM) it can be raised to 1024-2048 to amortize per-grid-step overhead.
    """
    assert stride == 1, "only stride=1 supported"            # TODO(synk): general stride
    if padding is None:
        padding = kernel_size // 2
    assert kernel_size % 2 == 1 and kernel_size >= 3, "odd kernel >= 3 only"
    assert padding == kernel_size // 2, "only 'same' padding supported"

    n, cin, length = x_ncl.shape
    w_dw = params["w_dw"]                    # (Cin, 1, K)   torch depthwise layout
    w_pw = params["w_pw"]                    # (Cout, Cin, 1)
    cout = w_pw.shape[0]
    use_res = (stride == 1) and (cin == cout)
    p = padding

    # ---- glue: BN folding (inference semantics) + weight prep (tiny constants) ----
    def fold_bn(gamma, beta, mean, var, eps=1e-5):
        s = gamma / jnp.sqrt(var + eps)
        b = beta - mean * s
        return s.astype(jnp.float32), b.astype(jnp.float32)

    sdw, bdw = fold_bn(*params["bn_dw"])                      # (Cin,)
    spw, bpw = fold_bn(*params["bn_pw"])                      # (Cout,)

    wdw = (w_dw[:, 0, :] * sdw[:, None]).astype(jnp.float32)  # (Cin, K) f32, scale folded
    bdw = bdw[:, None]                                        # (Cin, 1) f32
    wpw = w_pw[:, :, 0].astype(jnp.bfloat16)                  # (Cout, Cin) bf16, UNscaled
    spw = spw[:, None]                                        # (Cout, 1) f32
    bpw = bpw[:, None]                                        # (Cout, 1) f32

    # ---- length tiling + merged per-tile halo slab (no full-tensor pad) ----
    tl = _choose_tile(length, tl_target)
    nt = length // tl
    assert p <= tl and 2 * p <= tl, "padding must fit inside one length tile"

    x = x_ncl                                                 # (N, Cin, L), no layout pass
    xr = x.reshape(n, cin, nt, tl)
    zslab = jnp.zeros((n, cin, 1, p), x.dtype)
    lhalo = jnp.concatenate([zslab, xr[:, :, :-1, tl - p:]], axis=2)   # last P of prev tile
    rhalo = jnp.concatenate([xr[:, :, 1:, :p], zslab], axis=2)         # first P of next tile
    halo = jnp.concatenate([rhalo, lhalo], axis=3)                     # (N, Cin, nt, 2P)
    halo = jnp.transpose(halo, (0, 2, 1, 3))                           # (N, nt, Cin, 2P), tiny

    kern = functools.partial(_dsc_kernel, kernel_size=kernel_size, padding=p,
                             use_res=use_res)

    out = pl.pallas_call(
        kern,
        out_shape=jax.ShapeDtypeStruct((n, cout, length), x.dtype),
        grid_spec=pltpu.PrefetchScalarGridSpec(
            num_scalar_prefetch=0,
            grid=(n, nt),
            in_specs=[
                pl.BlockSpec((1, cin, tl), lambda i, j: (i, 0, j)),          # x tile
                pl.BlockSpec((1, 1, cin, 2 * p), lambda i, j: (i, j, 0, 0)), # merged halo
                pl.BlockSpec((cin, kernel_size), lambda i, j: (0, 0)),       # wdw (resident)
                pl.BlockSpec((cin, 1), lambda i, j: (0, 0)),                 # bdw (resident)
                pl.BlockSpec((cout, cin), lambda i, j: (0, 0)),              # wpw (resident)
                pl.BlockSpec((cout, 1), lambda i, j: (0, 0)),                # spw (resident)
                pl.BlockSpec((cout, 1), lambda i, j: (0, 0)),                # bpw (resident)
            ],
            out_specs=pl.BlockSpec((1, cout, tl), lambda i, j: (i, 0, j)),
            scratch_shapes=[pltpu.VMEM((cin, tl), x.dtype)],                 # circular ext
        ),
        compiler_params=pltpu.CompilerParams(
            dimension_semantics=("parallel", "parallel"),
            vmem_limit_bytes=32 * 1024 * 1024,
        ),
    )(x, halo, wdw, bdw, wpw, spw, bpw)

    return out                                                # (N, Cout, L), same dtype as input


def _reference(x_ncl, params, *, kernel_size=3, padding=None):
    """Pure-JAX f32 reference (NCL) matching the PyTorch forward pass."""
    if padding is None:
        padding = kernel_size // 2
    n, cin, length = x_ncl.shape
    w_dw, w_pw = params["w_dw"], params["w_pw"]
    cout = w_pw.shape[0]

    def bn(y, gamma, beta, mean, var, eps=1e-5):
        s = gamma / jnp.sqrt(var + eps)
        return y * s[None, :, None] + (beta - mean * s)[None, :, None]

    xp = jnp.pad(x_ncl, ((0, 0), (0, 0), (padding, padding)))
    y = jnp.zeros((n, cin, length), jnp.float32)
    for k in range(kernel_size):
        y = y + xp[:, :, k:k + length] * w_dw[:, 0, k][None, :, None]
    y = jnp.maximum(bn(y, *params["bn_dw"]), 0.0)
    z = jnp.einsum("ncl,oc->nol", y, w_pw[:, :, 0])
    z = jnp.maximum(bn(z, *params["bn_pw"]), 0.0)
    if cin == cout:
        z = z + x_ncl
    return z


if __name__ == "__main__":
    key = jax.random.PRNGKey(0)
    # in_channels == out_channels, stride=1 -> residual path.  L=256 with TL=128 so the
    # multi-tile halo / boundary-patch path is actually exercised.
    N, C, L, K = 2, 4, 256, 3
    ks = jax.random.split(key, 7)

    x = jax.random.normal(ks[0], (N, C, L), jnp.float32)

    params = {
        "w_dw": jax.random.normal(ks[1], (C, 1, K), jnp.float32) * 0.5,
        "w_pw": jax.random.normal(ks[2], (C, C, 1), jnp.float32) * 0.5,
        "bn_dw": (
            1.0 + 0.1 * jax.random.normal(ks[3], (C,), jnp.float32),            # gamma
            0.1 * jax.random.normal(ks[4], (C,), jnp.float32),                  # beta
            0.05 * jax.random.normal(ks[5], (C,), jnp.float32),                 # running mean
            jnp.abs(1.0 + 0.1 * jax.random.normal(ks[6], (C,), jnp.float32)),   # running var
        ),
        "bn_pw": (
            jnp.linspace(0.9, 1.1, C, dtype=jnp.float32),
            jnp.linspace(-0.1, 0.1, C, dtype=jnp.float32),
            jnp.linspace(-0.05, 0.05, C, dtype=jnp.float32),
            jnp.linspace(0.8, 1.2, C, dtype=jnp.float32),
        ),
    }

    out = depthwise_separable_conv(x, params, kernel_size=K, stride=1, tl_target=128)
    out = jax.block_until_ready(out)

    ref = _reference(x, params, kernel_size=K)

    assert out.shape == (N, C, L)
    rel = float(jnp.linalg.norm(out.astype(jnp.float32) - ref) / jnp.linalg.norm(ref))
    # Depthwise path and residual are f32; only the pointwise matmul operands are bf16
    # (f32 accumulate, f32 BN scale applied after) -> expect <1% relative error.
    assert rel < 2e-2, f"mismatch vs reference, rel L2 err = {rel}"

    print("KERNEL_OK")
</pallas_src>

<mosaic_0001>
module attributes {stable_mosaic.version = 11 : i64} {
  func.func @_dsc_kernel(%arg0: i32, %arg1: i32, %arg2: memref<1x4x128xf32, #tpu.memory_space<vmem>>, %arg3: memref<1x1x4x2xf32, #tpu.memory_space<vmem>>, %arg4: memref<4x3xf32, #tpu.memory_space<vmem>>, %arg5: memref<4x1xf32, #tpu.memory_space<vmem>>, %arg6: memref<4x4xbf16, #tpu.memory_space<vmem>>, %arg7: memref<4x1xf32, #tpu.memory_space<vmem>>, %arg8: memref<4x1xf32, #tpu.memory_space<vmem>>, %arg9: memref<1x4x128xf32, #tpu.memory_space<vmem>>, %arg10: memref<4x128xf32, #tpu.memory_space<vmem>>) attributes {dimension_semantics = [#tpu.dimension_semantics<parallel>, #tpu.dimension_semantics<parallel>], iteration_bounds = array<i64: 2, 2>, scalar_prefetch = 0 : i64, scratch_operands = 1 : i64, tpu.core_type = #tpu.core_type<tc>, window_params = [{transform_indices = @transform_0, window_bounds = array<i64: 1, 4, 128>}, {transform_indices = @transform_1, window_bounds = array<i64: 1, 1, 4, 2>}, {pipeline_mode = #tpu.pipeline_mode<synchronous>, transform_indices = @transform_2, window_bounds = array<i64: 4, 3>}, {pipeline_mode = #tpu.pipeline_mode<synchronous>, transform_indices = @transform_3, window_bounds = array<i64: 4, 1>}, {pipeline_mode = #tpu.pipeline_mode<synchronous>, transform_indices = @transform_4, window_bounds = array<i64: 4, 4>}, {pipeline_mode = #tpu.pipeline_mode<synchronous>, transform_indices = @transform_5, window_bounds = array<i64: 4, 1>}, {pipeline_mode = #tpu.pipeline_mode<synchronous>, transform_indices = @transform_6, window_bounds = array<i64: 4, 1>}, {transform_indices = @transform_7, window_bounds = array<i64: 1, 4, 128>}]} {
    %c0 = arith.constant 0 : index
    %c0_0 = arith.constant 0 : index
    %c0_1 = arith.constant 0 : index
    %0 = vector.load %arg2[%c0, %c0_0, %c0_1] : memref<1x4x128xf32, #tpu.memory_space<vmem>>, vector<1x4x128xf32>
    %1 = vector.shape_cast %0 : vector<1x4x128xf32> to vector<4x128xf32>
    %c0_2 = arith.constant 0 : index
    %c0_3 = arith.constant 0 : index
    %c0_4 = arith.constant 0 : index
    %c0_5 = arith.constant 0 : index
    %2 = vector.load %arg3[%c0_2, %c0_3, %c0_4, %c0_5] : memref<1x1x4x2xf32, #tpu.memory_space<vmem>>, vector<1x1x4x1xf32>
    %3 = vector.shape_cast %2 : vector<1x1x4x1xf32> to vector<4x1xf32>
    %c0_6 = arith.constant 0 : index
    %c0_7 = arith.constant 0 : index
    %4 = vector.load %arg10[%c0_6, %c0_7] : memref<4x128xf32, #tpu.memory_space<vmem>>, vector<4x1xf32>
    tpu.vector_store %arg10[%c0_6, %c0_7], %3 {strides = array<i32>} : memref<4x128xf32, #tpu.memory_space<vmem>>, vector<4x1xf32>,
    %c0_8 = arith.constant 0 : index
    %c0_9 = arith.constant 0 : index
    %c0_10 = arith.constant 0 : index
    %c1 = arith.constant 1 : index
    %5 = vector.load %arg3[%c0_8, %c0_9, %c0_10, %c1] : memref<1x1x4x2xf32, #tpu.memory_space<vmem>>, vector<1x1x4x1xf32>
    %6 = vector.shape_cast %5 : vector<1x1x4x1xf32> to vector<4x1xf32>
    %c0_11 = arith.constant 0 : index
    %c127 = arith.constant 127 : index
    %7 = vector.load %arg10[%c0_11, %c127] : memref<4x128xf32, #tpu.memory_space<vmem>>, vector<4x1xf32>
    tpu.vector_store %arg10[%c0_11, %c127], %6 {strides = array<i32>} : memref<4x128xf32, #tpu.memory_space<vmem>>, vector<4x1xf32>,
    %c0_12 = arith.constant 0 : index
    %c0_13 = arith.constant 0 : index
    %8 = vector.load %arg10[%c0_12, %c0_13] : memref<4x128xf32, #tpu.memory_space<vmem>>, vector<4x128xf32>
    %9 = tpu.iota {dimensions = array<i32: 1>} : vector<4x128xi32>
    %c0_14 = arith.constant 0 : index
    %c1_15 = arith.constant 1 : index
    %10 = vector.load %arg4[%c0_14, %c1_15] : memref<4x3xf32, #tpu.memory_space<vmem>>, vector<4x1xf32>
    %11 = vector.broadcast %10 : vector<4x1xf32> to vector<4x128xf32>
    %12 = arith.mulf %1, %11 : vector<4x128xf32>
    %c1_i32 = arith.constant 1 : i32
    %13 = tpu.dynamic_rotate %1 by %c1_i32 dim 1 : vector<4x128xf32>, i32 -> vector<4x128xf32>
    %c1_i32_16 = arith.constant 1 : i32
    %14 = tpu.dynamic_rotate %8 by %c1_i32_16 dim 1 : vector<4x128xf32>, i32 -> vector<4x128xf32>
    %c1_i32_17 = arith.constant 1 : i32
    %15 = vector.broadcast %c1_i32_17 : i32 to vector<4x128xi32>
    %16 = arith.cmpi slt, %9, %15 : vector<4x128xi32>
    %17 = arith.select %16, %14, %13 : vector<4x128xi1>, vector<4x128xf32>
    %c0_18 = arith.constant 0 : index
    %c0_19 = arith.constant 0 : index
    %18 = vector.load %arg4[%c0_18, %c0_19] : memref<4x3xf32, #tpu.memory_space<vmem>>, vector<4x1xf32>
    %19 = vector.broadcast %18 : vector<4x1xf32> to vector<4x128xf32>
    %20 = arith.mulf %17, %19 : vector<4x128xf32>
    %21 = arith.addf %12, %20 : vector<4x128xf32>
    %c127_i32 = arith.constant 127 : i32
    %22 = tpu.dynamic_rotate %1 by %c127_i32 dim 1 : vector<4x128xf32>, i32 -> vector<4x128xf32>
    %c127_i32_20 = arith.constant 127 : i32
    %23 = tpu.dynamic_rotate %8 by %c127_i32_20 dim 1 : vector<4x128xf32>, i32 -> vector<4x128xf32>
    %c127_i32_21 = arith.constant 127 : i32
    %24 = vector.broadcast %c127_i32_21 : i32 to vector<4x128xi32>
    %25 = arith.cmpi sge, %9, %24 : vector<4x128xi32>
    %26 = arith.select %25, %23, %22 : vector<4x128xi1>, vector<4x128xf32>
    %c0_22 = arith.constant 0 : index
    %c2 = arith.constant 2 : index
    %27 = vector.load %arg4[%c0_22, %c2] : memref<4x3xf32, #tpu.memory_space<vmem>>, vector<4x1xf32>
    %28 = vector.broadcast %27 : vector<4x1xf32> to vector<4x128xf32>
    %29 = arith.mulf %26, %28 : vector<4x128xf32>
    %30 = arith.addf %21, %29 : vector<4x128xf32>
    %c0_23 = arith.constant 0 : index
    %c0_24 = arith.constant 0 : index
    %31 = vector.load %arg5[%c0_23, %c0_24] : memref<4x1xf32, #tpu.memory_space<vmem>>, vector<4x1xf32>
    %32 = vector.broadcast %31 : vector<4x1xf32> to vector<4x128xf32>
    %33 = arith.addf %30, %32 : vector<4x128xf32>
    %cst = arith.constant 0.000000e+00 : f32
    %34 = vector.broadcast %cst : f32 to vector<4x128xf32>
    %35 = arith.maximumf %33, %34 : vector<4x128xf32>
    %c0_25 = arith.constant 0 : index
    %c0_26 = arith.constant 0 : index
    %36 = vector.load %arg6[%c0_25, %c0_26] : memref<4x4xbf16, #tpu.memory_space<vmem>>, vector<4x4xbf16>
    %37 = arith.truncf %35 : vector<4x128xf32> to vector<4x128xbf16>
    %cst_27 = arith.constant dense<0.000000e+00> : vector<4x128xf32>
    %38 = tpu.matmul %36, %37, %cst_27 {dimension_numbers = #tpu.dot_dimension_numbers<[1], [0], [0], [1], [0, 0, 1, 1], [], []>} : vector<4x4xbf16>, vector<4x128xbf16>, vector<4x128xf32> -> vector<4x128xf32>
    %c0_28 = arith.constant 0 : index
    %c0_29 = arith.constant 0 : index
    %39 = vector.load %arg7[%c0_28, %c0_29] : memref<4x1xf32, #tpu.memory_space<vmem>>, vector<4x1xf32>
    %40 = vector.broadcast %39 : vector<4x1xf32> to vector<4x128xf32>
    %41 = arith.mulf %38, %40 : vector<4x128xf32>
    %c0_30 = arith.constant 0 : index
    %c0_31 = arith.constant 0 : index
    %42 = vector.load %arg8[%c0_30, %c0_31] : memref<4x1xf32, #tpu.memory_space<vmem>>, vector<4x1xf32>
    %43 = vector.broadcast %42 : vector<4x1xf32> to vector<4x128xf32>
    %44 = arith.addf %41, %43 : vector<4x128xf32>
    %cst_32 = arith.constant 0.000000e+00 : f32
    %45 = vector.broadcast %cst_32 : f32 to vector<4x128xf32>
    %46 = arith.maximumf %44, %45 : vector<4x128xf32>
    %47 = arith.addf %46, %1 : vector<4x128xf32>
    %c0_33 = arith.constant 0 : index
    %c0_34 = arith.constant 0 : index
    %c0_35 = arith.constant 0 : index
    %48 = vector.load %arg9[%c0_33, %c0_34, %c0_35] : memref<1x4x128xf32, #tpu.memory_space<vmem>>, vector<1x4x128xf32>
    %49 = vector.shape_cast %48 : vector<1x4x128xf32> to vector<4x128xf32>
    %50 = vector.shape_cast %47 : vector<4x128xf32> to vector<1x4x128xf32>
    tpu.vector_store %arg9[%c0_33, %c0_34, %c0_35], %50 {strides = array<i32>} : memref<1x4x128xf32, #tpu.memory_space<vmem>>, vector<1x4x128xf32>,
    return
  }
  func.func @transform_0(%arg0: i32, %arg1: i32) -> (i32, i32, i32) {
    %c0_i32 = arith.constant 0 : i32
    %c0_i32_0 = arith.constant 0 : i32
    return %arg0, %c0_i32, %arg1 : i32, i32, i32
  }
  func.func @transform_1(%arg0: i32, %arg1: i32) -> (i32, i32, i32, i32) {
    %c0_i32 = arith.constant 0 : i32
    %c0_i32_0 = arith.constant 0 : i32
    %c0_i32_1 = arith.constant 0 : i32
    return %arg0, %arg1, %c0_i32, %c0_i32_0 : i32, i32, i32, i32
  }
  func.func @transform_2(%arg0: i32, %arg1: i32) -> (i32, i32) {
    %c0_i32 = arith.constant 0 : i32
    %c0_i32_0 = arith.constant 0 : i32
    %c0_i32_1 = arith.constant 0 : i32
    return %c0_i32, %c0_i32_0 : i32, i32
  }
  func.func @transform_3(%arg0: i32, %arg1: i32) -> (i32, i32) {
    %c0_i32 = arith.constant 0 : i32
    %c0_i32_0 = arith.constant 0 : i32
    %c0_i32_1 = arith.constant 0 : i32
    return %c0_i32, %c0_i32_0 : i32, i32
  }
  func.func @transform_4(%arg0: i32, %arg1: i32) -> (i32, i32) {
    %c0_i32 = arith.constant 0 : i32
    %c0_i32_0 = arith.constant 0 : i32
    %c0_i32_1 = arith.constant 0 : i32
    return %c0_i32, %c0_i32_0 : i32, i32
  }
  func.func @transform_5(%arg0: i32, %arg1: i32) -> (i32, i32) {
    %c0_i32 = arith.constant 0 : i32
    %c0_i32_0 = arith.constant 0 : i32
    %c0_i32_1 = arith.constant 0 : i32
    return %c0_i32, %c0_i32_0 : i32, i32
  }
  func.func @transform_6(%arg0: i32, %arg1: i32) -> (i32, i32) {
    %c0_i32 = arith.constant 0 : i32
    %c0_i32_0 = arith.constant 0 : i32
    %c0_i32_1 = arith.constant 0 : i32
    return %c0_i32, %c0_i32_0 : i32, i32
  }
  func.func @transform_7(%arg0: i32, %arg1: i32) -> (i32, i32, i32) {
    %c0_i32 = arith.constant 0 : i32
    %c0_i32_0 = arith.constant 0 : i32
    return %arg0, %c0_i32, %arg1 : i32, i32, i32
  }
}

</mosaic_0001>

<llo_original>
// kernel: tpu_custom_call.1
$region0: #{tpu_custom_call.1}
  #allocation0 [shape = 'u32[]', space=smem, size = 0x4, offset = 0x4, fixed_abs, tag = 'smem constant byte address 0x4 - core index']
  #allocation1 [shape = 'u32[144,128]{1,0:T(1,128)}', space=vmem, size = 0x12000, scoped, tag = 'internal scratch']
  #allocation2 [shape = 'f32[4,128]{1,0:T(4,128)}', space=vmem, size = 0x800, scoped, tag = 'scratch operand']
  %s0 = inlined_call_operand.vmem [shape: f32[2,4,256], index: 0, kind: input, shape index: {}]
  %s1 = inlined_call_operand.vmem [shape: f32[2,2,4,2], index: 1, kind: input, shape index: {}]
  %s2 = inlined_call_operand.vmem [shape: f32[4,3], index: 2, kind: input, shape index: {}]
  %s3 = inlined_call_operand.vmem [shape: f32[4,1], index: 3, kind: input, shape index: {}]
  %s4 = inlined_call_operand.vmem [shape: bf16[4,4], index: 4, kind: input, shape index: {}]
  %s5 = inlined_call_operand.vmem [shape: f32[4,1], index: 5, kind: input, shape index: {}]
  %s6 = inlined_call_operand.vmem [shape: f32[4,1], index: 6, kind: input, shape index: {}]
  %s7 = inlined_call_operand.hbm [shape: f32[2,4,256], index: 7, kind: output, shape index: {}]
  %s8 = sld [smem:[#allocation0]]
  $region61: #{tpu_custom_call.1} parent=0
    _
  %s10 = ssub.s32 1, %s8
  %s11 = scalar_select 0, %s10, %s8
  $region1: #{tpu_custom_call.1} parent=0
    #allocation3 [shape = 'u8[4096]{0}', space=vmem, size = 0x1000, scoped, tag = 'output window, operand 0']
    #allocation4 [shape = 's32[2]{0}', space=sflag, size = 0x8, scoped, tag = 'scoped memory for tpu_custom_call.1']
    %12 = vsyncpa [#allocation4], 0
    %s13 = scalar_lea.sflag [#allocation4], 1
    %14 = vsyncpa %s13, 0
    loop: start=0, step=1, limit=6
    $region2: #{tpu_custom_call.1} parent=1 // loop_pre_header
      _
    $region3: #{tpu_custom_call.1} parent=1 // loop_header
      %s16 = sphi 0, %s20
      %p17 = scmp.ge.s32.totalorder %s16, 6
      %s23 = sphi 0, %s35
      %s24 = sphi 0, %s31
      %s25 = sphi 0, %s23
      %s26 = sphi 0, %s24
      %s27 = sphi 0, %s25
      %s28 = sphi 0, %s26
      %s40 = sphi 0, %s42
      %s43 = sphi 0, %s40
      %s44 = sphi 0, %s43
      %s60 = sphi 0, %s44
      %s68 = sphi 0, %s70
      %s71 = sphi 0, %s68
      %s72 = sphi 0, %s71
      %s88 = sphi 0, %s72
      %s92 = sphi 0, %s92
      %s94 = sphi 0, %s92
      %s95 = sphi 0, %s94
      %s109 = sphi 0, %s95
      %s113 = sphi 0, %s113
      %s115 = sphi 0, %s113
      %s116 = sphi 0, %s115
      %s130 = sphi 0, %s116
      %s134 = sphi 0, %s134
      %s136 = sphi 0, %s134
      %s137 = sphi 0, %s136
      %s151 = sphi 0, %s137
      %s155 = sphi 0, %s155
      %s157 = sphi 0, %s155
      %s158 = sphi 0, %s157
      %s172 = sphi 0, %s158
      %s176 = sphi 0, %s176
      %s178 = sphi 0, %s176
      %s179 = sphi 0, %s178
      %s193 = sphi 0, %s179
      %s201 = sphi 0, %s203
      %s204 = sphi 0, %s201
      %s205 = sphi 0, %s204
      %s221 = sphi 0, %s205
    $region4: #{tpu_custom_call.1} parent=1 // loop_header_branch
      %19 = sbr.rel (%p17) target = $region8
    $region5: #{tpu_custom_call.1} parent=1 // loop_body
      %s21 = ssub.s32 %s16, 1
      %s22 = ssub.s32 %s16, 2
      %s29 = sadd.s32 1, %s24
      %p30 = scmp.ge.s32.totalorder %s29, 2
      %s31 = scalar_select %p30, 0, %s29
      %s32 = sadd.s32 1, %s23
      %s33 = scalar_select %p30, %s32, %s23
      %p34 = scmp.ge.s32.totalorder %s33, 2
      %s35 = scalar_select %p34, 0, %s33
      %s36 = ssub.s32 %s23, %s35
      %s37 = ssub.s32 %s24, %s31
      %s38 = sor.u32 %s36, %s37
      %p39 = scmp.eq.s32.totalorder %s38, 0
      %s41 = sadd.s32 %s40, 1
      %s42 = scalar_select %p39, %s40, %s41
      %p45 = pneg %p39
      %p46 = scmp.eq.s32.totalorder %s16, 3
      %p47 = por %p45, %p46
      %p48 = scmp.ne.s32.totalorder %s40, %s43
      %p49 = scmp.eq.s32.totalorder %s16, 0
      %p50 = por %p48, %p49
      %p51 = scmp.ne.s32.totalorder %s40, %s43
      %p52 = scmp.eq.s32.totalorder %s21, 3
      %p53 = por %p51, %p52
      %p54 = scmp.ne.s32.totalorder %s43, %s44
      %p55 = scmp.eq.s32.totalorder %s21, 0
      %p56 = por %p54, %p55
      %p57 = scmp.ne.s32.totalorder %s43, %s44
      %p58 = scmp.eq.s32.totalorder %s22, 3
      %p59 = por %p57, %p58
      %p61 = scmp.ne.s32.totalorder %s44, %s60
      %p62 = scmp.eq.s32.totalorder %s22, 0
      %p63 = por %p61, %p62
      %s64 = ssub.s32 %s23, %s35
      %s65 = ssub.s32 %s24, %s31
      %s66 = sor.u32 %s64, %s65
      %p67 = scmp.eq.s32.totalorder %s66, 0
      %s69 = sadd.s32 %s68, 1
      %s70 = scalar_select %p67, %s68, %s69
      %p73 = pneg %p67
      %p74 = scmp.eq.s32.totalorder %s16, 3
      %p75 = por %p73, %p74
      %p76 = scmp.ne.s32.totalorder %s68, %s71
      %p77 = scmp.eq.s32.totalorder %s16, 0
      %p78 = por %p76, %p77
      %p79 = scmp.ne.s32.totalorder %s68, %s71
      %p80 = scmp.eq.s32.totalorder %s21, 3
      %p81 = por %p79, %p80
      %p82 = scmp.ne.s32.totalorder %s71, %s72
      %p83 = scmp.eq.s32.totalorder %s21, 0
      %p84 = por %p82, %p83
      %p85 = scmp.ne.s32.totalorder %s71, %s72
      %p86 = scmp.eq.s32.totalorder %s22, 3
      %p87 = por %p85, %p86
      %p89 = scmp.ne.s32.totalorder %s72, %s88
      %p90 = scmp.eq.s32.totalorder %s22, 0
      %p91 = por %p89, %p90
      %s93 = sadd.s32 %s92, 1
      %p96 = scmp.eq.s32.totalorder %s16, 3
      %p97 = scmp.ne.s32.totalorder %s92, %s94
      %p98 = scmp.eq.s32.totalorder %s16, 0
      %p99 = por %p97, %p98
      %p100 = scmp.ne.s32.totalorder %s92, %s94
      %p101 = scmp.eq.s32.totalorder %s21, 3
      %p102 = por %p100, %p101
      %p103 = scmp.ne.s32.totalorder %s94, %s95
      %p104 = scmp.eq.s32.totalorder %s21, 0
      %p105 = por %p103, %p104
      %p106 = scmp.ne.s32.totalorder %s94, %s95
      %p107 = scmp.eq.s32.totalorder %s22, 3
      %p108 = por %p106, %p107
      %p110 = scmp.ne.s32.totalorder %s95, %s109
      %p111 = scmp.eq.s32.totalorder %s22, 0
      %p112 = por %p110, %p111
      %s114 = sadd.s32 %s113, 1
      %p117 = scmp.eq.s32.totalorder %s16, 3
      %p118 = scmp.ne.s32.totalorder %s113, %s115
      %p119 = scmp.eq.s32.totalorder %s16, 0
      %p120 = por %p118, %p119
      %p121 = scmp.ne.s32.totalorder %s113, %s115
      %p122 = scmp.eq.s32.totalorder %s21, 3
      %p123 = por %p121, %p122
      %p124 = scmp.ne.s32.totalorder %s115, %s116
      %p125 = scmp.eq.s32.totalorder %s21, 0
      %p126 = por %p124, %p125
      %p127 = scmp.ne.s32.totalorder %s115, %s116
      %p128 = scmp.eq.s32.totalorder %s22, 3
      %p129 = por %p127, %p128
      %p131 = scmp.ne.s32.totalorder %s116, %s130
      %p132 = scmp.eq.s32.totalorder %s22, 0
      %p133 = por %p131, %p132
      %s135 = sadd.s32 %s134, 1
      %p138 = scmp.eq.s32.totalorder %s16, 3
      %p139 = scmp.ne.s32.totalorder %s134, %s136
      %p140 = scmp.eq.s32.totalorder %s16, 0
      %p141 = por %p139, %p140
      %p142 = scmp.ne.s32.totalorder %s134, %s136
      %p143 = scmp.eq.s32.totalorder %s21, 3
      %p144 = por %p142, %p143
      %p145 = scmp.ne.s32.totalorder %s136, %s137
      %p146 = scmp.eq.s32.totalorder %s21, 0
      %p147 = por %p145, %p146
      %p148 = scmp.ne.s32.totalorder %s136, %s137
      %p149 = scmp.eq.s32.totalorder %s22, 3
      %p150 = por %p148, %p149
      %p152 = scmp.ne.s32.totalorder %s137, %s151
      %p153 = scmp.eq.s32.totalorder %s22, 0
      %p154 = por %p152, %p153
      %s156 = sadd.s32 %s155, 1
      %p159 = scmp.eq.s32.totalorder %s16, 3
      %p160 = scmp.ne.s32.totalorder %s155, %s157
      %p161 = scmp.eq.s32.totalorder %s16, 0
      %p162 = por %p160, %p161
      %p163 = scmp.ne.s32.totalorder %s155, %s157
      %p164 = scmp.eq.s32.totalorder %s21, 3
      %p165 = por %p163, %p164
      %p166 = scmp.ne.s32.totalorder %s157, %s158
      %p167 = scmp.eq.s32.totalorder %s21, 0
      %p168 = por %p166, %p167
      %p169 = scmp.ne.s32.totalorder %s157, %s158
      %p170 = scmp.eq.s32.totalorder %s22, 3
      %p171 = por %p169, %p170
      %p173 = scmp.ne.s32.totalorder %s158, %s172
      %p174 = scmp.eq.s32.totalorder %s22, 0
      %p175 = por %p173, %p174
      %s177 = sadd.s32 %s176, 1
      %p180 = scmp.eq.s32.totalorder %s16, 3
      %p181 = scmp.ne.s32.totalorder %s176, %s178
      %p182 = scmp.eq.s32.totalorder %s16, 0
      %p183 = por %p181, %p182
      %p184 = scmp.ne.s32.totalorder %s176, %s178
      %p185 = scmp.eq.s32.totalorder %s21, 3
      %p186 = por %p184, %p185
      %p187 = scmp.ne.s32.totalorder %s178, %s179
      %p188 = scmp.eq.s32.totalorder %s21, 0
      %p189 = por %p187, %p188
      %p190 = scmp.ne.s32.totalorder %s178, %s179
      %p191 = scmp.eq.s32.totalorder %s22, 3
      %p192 = por %p190, %p191
      %p194 = scmp.ne.s32.totalorder %s179, %s193
      %p195 = scmp.eq.s32.totalorder %s22, 0
      %p196 = por %p194, %p195
      %s197 = ssub.s32 %s23, %s35
      %s198 = ssub.s32 %s24, %s31
      %s199 = sor.u32 %s197, %s198
      %p200 = scmp.eq.s32.totalorder %s199, 0
      %s202 = sadd.s32 %s201, 1
      %s203 = scalar_select %p200, %s201, %s202
      %p206 = pneg %p200
      %p207 = scmp.eq.s32.totalorder %s16, 3
      %p208 = por %p206, %p207
      %p209 = scmp.ne.s32.totalorder %s201, %s204
      %p210 = scmp.eq.s32.totalorder %s16, 0
      %p211 = por %p209, %p210
      %p212 = scmp.ne.s32.totalorder %s201, %s204
      %p213 = scmp.eq.s32.totalorder %s21, 3
      %p214 = por %p212, %p213
      %p215 = scmp.ne.s32.totalorder %s204, %s205
      %p216 = scmp.eq.s32.totalorder %s21, 0
      %p217 = por %p215, %p216
      %p218 = scmp.ne.s32.totalorder %s204, %s205
      %p219 = scmp.eq.s32.totalorder %s22, 3
      %p220 = por %p218, %p219
      %p222 = scmp.ne.s32.totalorder %s205, %s221
      %p223 = scmp.eq.s32.totalorder %s22, 0
      %p224 = por %p222, %p223
      %p225 = scmp.le.s32.totalorder 1, %s16
      %p226 = scmp.lt.s32.totalorder %s16, 5
      %p227 = pnand %p225, %p226
      %p228 = pneg %p227
      // Predicated region
      $region9: #{tpu_custom_call.1} parent=5 // pred_check
        _
      $region10: #{tpu_custom_call.1} parent=5 // pred_check_branch
        %230 = sbr.rel (%p227) target = $region12
      $region11: #{tpu_custom_call.1} parent=5 // pred_region
        %s231 = ssub.s32 %s16, 1
        // Predicated region
        $region13: #{tpu_custom_call.1} parent=11 // pred_check
          %p232 = pneg %p105
        $region14: #{tpu_custom_call.1} parent=11 // pred_check_branch
          %234 = sbr.rel (%p232) target = $region16
        $region15: #{tpu_custom_call.1} parent=11 // pred_region
          _
        $region16: #{tpu_custom_call.1} parent=11 // pred_fallthru
          _
        // Predicated region
        $region17: #{tpu_custom_call.1} parent=11 // pred_check
          %p235 = pneg %p126
        $region18: #{tpu_custom_call.1} parent=11 // pred_check_branch
          %237 = sbr.rel (%p235) target = $region20
        $region19: #{tpu_custom_call.1} parent=11 // pred_region
          _
        $region20: #{tpu_custom_call.1} parent=11 // pred_fallthru
          _
        // Predicated region
        $region21: #{tpu_custom_call.1} parent=11 // pred_check
          %p238 = pneg %p147
        $region22: #{tpu_custom_call.1} parent=11 // pred_check_branch
          %240 = sbr.rel (%p238) target = $region24
        $region23: #{tpu_custom_call.1} parent=11 // pred_region
          _
        $region24: #{tpu_custom_call.1} parent=11 // pred_fallthru
          _
        // Predicated region
        $region25: #{tpu_custom_call.1} parent=11 // pred_check
          %p241 = pneg %p168
        $region26: #{tpu_custom_call.1} parent=11 // pred_check_branch
          %243 = sbr.rel (%p241) target = $region28
        $region27: #{tpu_custom_call.1} parent=11 // pred_region
          _
        $region28: #{tpu_custom_call.1} parent=11 // pred_fallthru
          _
        // Predicated region
        $region29: #{tpu_custom_call.1} parent=11 // pred_check
          %p244 = pneg %p189
        $region30: #{tpu_custom_call.1} parent=11 // pred_check_branch
          %246 = sbr.rel (%p244) target = $region32
        $region31: #{tpu_custom_call.1} parent=11 // pred_region
          _
        $region32: #{tpu_custom_call.1} parent=11 // pred_fallthru
          _
      $region12: #{tpu_custom_call.1} parent=5 // pred_fallthru
        _
      %p247 = scmp.lt.s32.totalorder %s16, 4
      // Predicated region
      $region33: #{tpu_custom_call.1} parent=5 // pred_check
        %p248 = pneg %p247
      $region34: #{tpu_custom_call.1} parent=5 // pred_check_branch
        %250 = sbr.rel (%p248) target = $region36
      $region35: #{tpu_custom_call.1} parent=5 // pred_region
        // Predicated region
        $region37: #{tpu_custom_call.1} parent=35 // pred_check
          %p251 = pneg %p50
        $region38: #{tpu_custom_call.1} parent=35 // pred_check_branch
          %253 = sbr.rel (%p251) target = $region40
        $region39: #{tpu_custom_call.1} parent=35 // pred_region
          %p254 = scmp.lt.s32.totalorder %s23, 1
          %s255 = scalar_select %p254, %s23, 1
          %p256 = scmp.lt.s32.totalorder %s24, 1
          %s257 = scalar_select %p256, %s24, 1
          %s258 = smul.addr %s255, 2
          %s259 = sadd.s32 %s257, %s258
          %s260 = smul.addr %s259, 4
          %s261 = scalar_lea.vmem %s0, %s260
        $region40: #{tpu_custom_call.1} parent=35 // pred_fallthru
          _
        // Predicated region
        $region41: #{tpu_custom_call.1} parent=35 // pred_check
          %p262 = pneg %p78
        $region42: #{tpu_custom_call.1} parent=35 // pred_check_branch
          %264 = sbr.rel (%p262) target = $region44
        $region43: #{tpu_custom_call.1} parent=35 // pred_region
          %p265 = scmp.lt.s32.totalorder %s23, 1
          %s266 = scalar_select %p265, %s23, 1
          %p267 = scmp.lt.s32.totalorder %s24, 1
          %s268 = scalar_select %p267, %s24, 1
          %s269 = smul.addr %s266, 2
          %s270 = sadd.s32 %s268, %s269
          %s271 = smul.addr %s270, 4
          %s272 = scalar_lea.vmem %s1, %s271
        $region44: #{tpu_custom_call.1} parent=35 // pred_fallthru
          _
      $region36: #{tpu_custom_call.1} parent=5 // pred_fallthru
        _
      %p273 = scmp.le.s32.totalorder 1, %s16
      %p274 = scmp.lt.s32.totalorder %s16, 5
      %p275 = pnand %p273, %p274
      %p276 = pneg %p275
      // Predicated region
      $region45: #{tpu_custom_call.1} parent=5 // pred_check
        _
      $region46: #{tpu_custom_call.1} parent=5 // pred_check_branch
        %278 = sbr.rel (%p275) target = $region48
      $region47: #{tpu_custom_call.1} parent=5 // pred_region
        %s279 = ssub.s32 %s16, 1
        %p280 = scmp.lt.s32.totalorder %s25, 1
        %s281 = scalar_select %p280, %s25, 1
        %p282 = scmp.lt.s32.totalorder %s26, 1
        %s283 = scalar_select %p282, %s26, 1
        %s284 = smul.addr %s281, 2
        %s285 = sadd.s32 %s283, %s284
        %s286 = smul.addr %s285, 4
        %s287 = scalar_lea.vmem %s0, %s286
        %p288 = pneg %p56
        %p289 = pneg %p53
        %p290 = scmp.lt.s32.totalorder %s25, 1
        %s291 = scalar_select %p290, %s25, 1
        %p292 = scmp.lt.s32.totalorder %s26, 1
        %s293 = scalar_select %p292, %s26, 1
        %s294 = smul.addr %s291, 2
        %s295 = sadd.s32 %s293, %s294
        %s296 = smul.addr %s295, 4
        %s297 = scalar_lea.vmem %s1, %s296
        %p298 = pneg %p84
        %p299 = pneg %p81
        %p300 = pneg %p105
        %p301 = pneg %p102
        %p302 = pneg %p126
        %p303 = pneg %p123
        %p304 = pneg %p147
        %p305 = pneg %p144
        %p306 = pneg %p168
        %p307 = pneg %p165
        %p308 = pneg %p189
        %p309 = pneg %p186
        %p310 = pneg %p217
        %p311 = pneg %p214
        %s312 = sand.u32 %s204, 1
        %s313 = scalar_lea.sflag [#allocation4], %s312
        %s314 = sand.u32 %s204, 1
        %s315 = smul.addr %s314, 4
        %s316 = scalar_lea.vmem [#allocation3], %s315
        %p317 = scmp.lt.s32.totalorder %s25, 1
        %s318 = scalar_select %p317, %s25, 1
        %p319 = scmp.lt.s32.totalorder %s26, 1
        %s320 = scalar_select %p319, %s26, 1
        %s321 = smul.addr %s318, 2
        %s322 = sadd.s32 %s320, %s321
        %s323 = smul.addr %s322, 4
        %s324 = scalar_lea.vmem %s0, %s323
        %p325 = scmp.lt.s32.totalorder %s25, 1
        %s326 = scalar_select %p325, %s25, 1
        %p327 = scmp.lt.s32.totalorder %s26, 1
        %s328 = scalar_select %p327, %s26, 1
        %s329 = smul.addr %s326, 2
        %s330 = sadd.s32 %s328, %s329
        %s331 = smul.addr %s330, 4
        %s332 = scalar_lea.vmem %s1, %s331
        %v334 = vld [vmem:[%s324] sm:$0xf]
        %v335 = vld [vmem:[%s332] sm:$0xf]
        %vm336 = vcmask 3072
        %337 = vst.msk [vmem:[#allocation2] sm:$0xf] %vm336, %v335
        %v338 = vld [vmem:[%s332] sm:$0xf]
        %340 = vrot.lane.b32.xlu0 %v338, 126
        %v341 = vpop.permute.xlu0 %340
        %vm343 = vcmask 1044472
        %344 = vst.msk [vmem:[#allocation2] sm:$0xf] %vm343, %v341
        %v345 = vld [vmem:[#allocation2] sm:$0xf]
        %v346 = vlaneseq
        %v347 = vand.u32 %v346, 127
        %v348 = vld [vmem:[%s2] sm:$0xf]
        %350 = vset.pattern.permute.xlu0 1
        %351 = vperm.xlu0 %350, %v348
        %v352 = vpop.permute.xlu0 %351
        %v354 = vmul.f32 %v334, %v352
        %355 = vrot.lane.b32.xlu0 %v334, 1
        %v356 = vpop.permute.xlu0 %355
        %357 = vrot.lane.b32.xlu0 %v345, 1
        %v358 = vpop.permute.xlu0 %357
        %vm359 = vcmp.lt.s32.totalorder %v347, 1
        %v360 = vsel %vm359, %v358, %v356
        %361 = vset.pattern.permute.xlu0 0
        %362 = vperm.xlu0 %361, %v348
        %v363 = vpop.permute.xlu0 %362
        %v365 = vmul.f32 %v360, %v363
        %v366 = vadd.f32 %v354, %v365
        %367 = vrot.lane.b32.xlu0 %v334, 127
        %v368 = vpop.permute.xlu0 %367
        %369 = vrot.lane.b32.xlu0 %v345, 127
        %v370 = vpop.permute.xlu0 %369
        %vm371 = vcmp.ge.s32.totalorder %v347, 127
        %v372 = vsel %vm371, %v370, %v368
        %373 = vset.pattern.permute.xlu0 2
        %374 = vperm.xlu0 %373, %v348
        %v375 = vpop.permute.xlu0 %374
        %v377 = vmul.f32 %v372, %v375
        %v378 = vadd.f32 %v366, %v377
        %v379 = vld [vmem:[%s3] sm:$0xf]
        %381 = vset.pattern.permute.xlu0 0
        %382 = vperm.xlu0 %381, %v379
        %v383 = vpop.permute.xlu0 %382
        %v385 = vadd.f32 %v378, %v383
        %v386 = vmax.f32 %v385, 0.0
        %v387 = vld [vmem:[%s4] sm:$0x3]
        %v388 = vpack.c.bf16 %v386, %v386
        %vm389 = vcmask 31744
        %v391 = vsel %vm389, %v387, 0
        %vm393 = vcmask 1041408
        %v395 = vsel %vm393, %v388, 0
        %397 = vmatprep.subr.bf16.mxu0 0
        %398 = vmatpush1.bf16.msra.mxu0 %v395
        %399 = vmatprep.subr.bf16.mxu0 0
        %400 = vmatpush1.bf16.msra.mxu0 0
        %401 = vmatprep.subr.bf16.mxu0 0
        %402 = vmatpush1.bf16.msra.mxu0 0
        %403 = vmatprep.subr.bf16.mxu0 0
        %404 = vmatpush1.bf16.msra.mxu0 0
        %405 = vmatprep.subr.bf16.mxu0 0
        %406 = vmatpush1.bf16.msra.mxu0 0
        %407 = vmatprep.subr.bf16.mxu0 0
        %408 = vmatpush1.bf16.msra.mxu0 0
        %409 = vmatprep.subr.bf16.mxu0 0
        %410 = vmatpush1.bf16.msra.mxu0 0
        %411 = vmatprep.subr.bf16.mxu0 0
        %412 = vmatpush1.bf16.msra.mxu0 0
        %413 = vmatprep.subr.bf16.mxu0 0
        %414 = vmatpush1.bf16.msra.mxu0 0
        %415 = vmatprep.subr.bf16.mxu0 0
        %416 = vmatpush1.bf16.msra.mxu0 0
        %417 = vmatprep.subr.bf16.mxu0 0
        %418 = vmatpush1.bf16.msra.mxu0 0
        %419 = vmatprep.subr.bf16.mxu0 0
        %420 = vmatpush1.bf16.msra.mxu0 0
        %421 = vmatprep.subr.bf16.mxu0 0
        %422 = vmatpush1.bf16.msra.mxu0 0
        %423 = vmatprep.subr.bf16.mxu0 0
        %424 = vmatpush1.bf16.msra.mxu0 0
        %425 = vmatprep.subr.bf16.mxu0 0
        %426 = vmatpush1.bf16.msra.mxu0 0
        %427 = vmatprep.subr.bf16.mxu0 0
        %428 = vmatpush1.bf16.msra.mxu0 0
        %429 = vmatprep.mubr.bf16.mxu0 0
        %430 = vmatmul.mubr.bf16.gmra.mrb[0].mxu0 %v391
        %v431 = vpop.f32.mrb[0].mxu0
        %v432 = vadd.f32 0.0, %v431
        %v433 = vpop.f32.mrb[0].mxu0
        %v434 = vpop.f32.mrb[0].mxu0
        %v435 = vpop.f32.mrb[0].mxu0
        %436 = vdwg.mxu0
        %v437 = vld [vmem:[%s5] sm:$0xf]
        %439 = vset.pattern.permute.xlu0 0
        %440 = vperm.xlu0 %439, %v437
        %v441 = vpop.permute.xlu0 %440
        %v443 = vmul.f32 %v432, %v441
        %v444 = vld [vmem:[%s6] sm:$0xf]
        %446 = vset.pattern.permute.xlu0 0
        %447 = vperm.xlu0 %446, %v444
        %v448 = vpop.permute.xlu0 %447
        %v450 = vadd.f32 %v443, %v448
        %v451 = vmax.f32 %v450, 0.0
        %v452 = vadd.f32 %v451, %v334
        %453 = vst [vmem:[%s316] sm:$0xf] %v452
        %s454 = sand.u32 %s204, 1
        %s455 = scalar_lea.sflag [#allocation4], %s454
        %s456 = sand.u32 %s204, 1
        %s457 = smul.addr %s456, 4
        %s458 = scalar_lea.vmem [#allocation3], %s457
        // Predicated region
        $region49: #{tpu_custom_call.1} parent=47 // pred_check
          %p459 = pneg %p214
        $region50: #{tpu_custom_call.1} parent=47 // pred_check_branch
          %461 = sbr.rel (%p459) target = $region52
        $region51: #{tpu_custom_call.1} parent=47 // pred_region
          %s463 = ssub.s32 64, 64
          %464 = vsyncadd %s455, %s463
          %s465 = smul.addr %s25, 2
          %s466 = sadd.s32 %s26, %s465
          %s467 = smul.addr %s466, 64
          %s468 = scalar_lea.hbm %s7, %s467
          %s470 = sshll.u32 %s458, 4
          %s471 = int_to_ptr.vmem [resolvable:$true] %s470
          %473 = dma.vmem_to_hbm [thread:$0]  %s471, 64, %s468, %s455
        $region52: #{tpu_custom_call.1} parent=47 // pred_fallthru
          _
      $region48: #{tpu_custom_call.1} parent=5 // pred_fallthru
        _
      %p474 = scmp.le.s32.totalorder 2, %s16
      // Predicated region
      $region53: #{tpu_custom_call.1} parent=5 // pred_check
        %p475 = pneg %p474
      $region54: #{tpu_custom_call.1} parent=5 // pred_check_branch
        %477 = sbr.rel (%p475) target = $region56
      $region55: #{tpu_custom_call.1} parent=5 // pred_region
        %s478 = ssub.s32 %s16, 2
        // Predicated region
        $region57: #{tpu_custom_call.1} parent=55 // pred_check
          %p479 = pneg %p220
        $region58: #{tpu_custom_call.1} parent=55 // pred_check_branch
          %481 = sbr.rel (%p479) target = $region60
        $region59: #{tpu_custom_call.1} parent=55 // pred_region
          %s482 = sand.u32 %s205, 1
          %s483 = scalar_lea.sflag [#allocation4], %s482
          %s484 = sand.u32 %s205, 1
          %s485 = smul.addr %s484, 4
          %s486 = scalar_lea.vmem [#allocation3], %s485
          %487 = dma.done %s483, 64
        $region60: #{tpu_custom_call.1} parent=55 // pred_fallthru
          _
      $region56: #{tpu_custom_call.1} parent=5 // pred_fallthru
        _
    $region6: #{tpu_custom_call.1} parent=1 // loop_footer
      %s20 = sadd.s32 1, %s16
    $region7: #{tpu_custom_call.1} parent=1 // loop_footer_branch
      %15 = sbr.rel target = $region3
    $region8: #{tpu_custom_call.1} parent=1 // loop_exit
      _
    %488 = vsyncpa [#allocation4], 1
    %s489 = scalar_lea.sflag [#allocation4], 1
    %490 = vsyncpa %s489, 1

</llo_original>
